<compile_context>
chip_gen: v6e
topology: v6e:2x2x1
jax: 0.10.0
libtpu: 0.0.40
codegen_flags: <defaults>
</compile_context>

<pallas_src>
import functools

import jax
import jax.numpy as jnp
from jax.experimental import pallas as pl
from jax.experimental.pallas import tpu as pltpu


def _round_up(x, m):
    return ((x + m - 1) // m) * m


def _has_bf16_vpu():
    """bf16 VPU path exists on v6e/v7x; v5e (and older) should keep f32 epilogues."""
    try:
        kind = jax.devices()[0].device_kind.lower()
    except Exception:
        return False
    return ("v6" in kind) or ("v7" in kind)


def qnetwork_kernel(x_ref, w1_ref, b1_ref, w2_ref, b2_ref, w3_ref, o_ref, *,
                    bf16_epilogue):
    """One batch tile of the 3-layer MLP (bias b3 is folded into the wrapper)."""
    x = x_ref[...]                                               # (TM, D_in) bf16

    # Layer 1: single bf16 MXU matmul (concat already fused in the wrapper), f32 accumulation.
    h1 = jnp.dot(x, w1_ref[...], preferred_element_type=jnp.float32)

    if bf16_epilogue:
        # v6e/v7x: bf16 VPU -> half the VALU work / vreg pressure on the (TM, 256) tiles.
        h1 = jnp.maximum(h1.astype(jnp.bfloat16) + b1_ref[...], 0.0)
        h2 = jnp.dot(h1, w2_ref[...], preferred_element_type=jnp.float32)
        h2 = jnp.maximum(h2.astype(jnp.bfloat16) + b2_ref[...], 0.0)
    else:
        # v5e: VPU has no bf16 path, keep the epilogues in f32.
        h1 = jnp.maximum(h1 + b1_ref[...], 0.0)
        h2 = jnp.dot(h1.astype(jnp.bfloat16), w2_ref[...],
                     preferred_element_type=jnp.float32)
        h2 = jnp.maximum(h2 + b2_ref[...], 0.0)

    # Layer 3 (256 -> 1): VPU multiply + XLU lane reduction instead of an N=1 MXU matmul.
    # w3 stays f32 so the product/reduction accumulate in f32 regardless of epilogue dtype.
    q = jnp.sum(h2 * w3_ref[...], axis=-1)                       # (TM,) f32

    # Lane-dense store: one (1, 1, TM) row per tile (TM/128 stores vs TM/8 masked stores).
    o_ref[...] = q[None, None, :]


def qnetwork_forward(state, action, params, *, tile_m=1024, bf16_epilogue=None):
    """Pallas equivalent of QNetwork.forward(state, action) -> (B, 1) float32."""
    w1, b1, w2, b2, w3, b3 = params
    B, n_obs = state.shape
    n_act = action.shape[1]
    d_in = n_obs + n_act
    H = w2.shape[0]

    if bf16_epilogue is None:
        bf16_epilogue = _has_bf16_vpu()
    ep_dt = jnp.bfloat16 if bf16_epilogue else jnp.float32

    # Fuse the concat in the wrapper and stream a single bf16 input: halves input HBM bytes,
    # removes a DMA stream/BlockSpec and the per-tile VPU casts inside the kernel.
    x = jnp.concatenate((state, action), axis=1).astype(jnp.bfloat16)

    # Batch tiling: sublane dim must be a multiple of 8; pad B up to the tile.
    TM = max(8, min(tile_m, _round_up(B, 8)))
    B_pad = _round_up(B, TM)
    if B_pad != B:
        x = jnp.pad(x, ((0, B_pad - B), (0, 0)))
    num_tiles = B_pad // TM

    # Weights: (in_features, out_features) so x @ W + b == torch's x @ W.T + b.
    w1b = w1.astype(jnp.bfloat16)
    w2b = w2.astype(jnp.bfloat16)
    b1r = b1.reshape(1, H).astype(ep_dt)
    b2r = b2.reshape(1, H).astype(ep_dt)
    w3r = w3.reshape(1, H).astype(jnp.float32)

    x_spec = pl.BlockSpec((TM, d_in), lambda i: (i, 0))              # streamed per batch tile
    resident = lambda shape: pl.BlockSpec(shape, lambda i: (0, 0))   # VMEM-resident weights

    kernel = functools.partial(qnetwork_kernel, bf16_epilogue=bf16_epilogue)

    out = pl.pallas_call(
        kernel,
        # Lane-dense output: (num_tiles, 1, TM) rows instead of a (B_pad, 1) column.
        out_shape=jax.ShapeDtypeStruct((num_tiles, 1, TM), jnp.float32),
        grid=(num_tiles,),
        in_specs=[
            x_spec,
            resident((d_in, H)),
            resident((1, H)),
            resident((H, H)),
            resident((1, H)),
            resident((1, H)),
        ],
        out_specs=pl.BlockSpec((1, 1, TM), lambda i: (i, 0, 0)),
        compiler_params=pltpu.CompilerParams(
            # Megacore-shardable batch axis (harmless on single-TC v5e/v6e). On v7x, switch
            # this axis to pltpu.CORE_PARALLEL (with an even number of tiles) to use both TCs.
            dimension_semantics=("parallel",),
        ),
    )(x, w1b, b1r, w2b, b2r, w3r)

    # Free contiguous reshape back to a batch column; fold b3 here (saves a padded (1,1)
    # VMEM block + DMA stream in the kernel).
    return out.reshape(B_pad, 1)[:B] + b3.astype(jnp.float32)


def init_params(key, n_obs, n_act, hidden=256):
    """Synthetic parameters with the same shapes/semantics as the PyTorch module."""
    d_in = n_obs + n_act
    ks = jax.random.split(key, 6)

    def u(k, shape, fan_in):
        bound = 1.0 / jnp.sqrt(fan_in)
        return jax.random.uniform(k, shape, jnp.float32, -bound, bound)

    w1 = u(ks[0], (d_in, hidden), d_in)
    b1 = u(ks[1], (hidden,), d_in)
    w2 = u(ks[2], (hidden, hidden), hidden)
    b2 = u(ks[3], (hidden,), hidden)
    w3 = u(ks[4], (hidden, 1), hidden)
    b3 = u(ks[5], (1,), hidden)
    return (w1, b1, w2, b2, w3, b3)


def _reference(state, action, params):
    w1, b1, w2, b2, w3, b3 = params
    x = jnp.concatenate((state, action), axis=1)
    h = jnp.maximum(x @ w1 + b1, 0.0)
    h = jnp.maximum(h @ w2 + b2, 0.0)
    return h @ w3 + b3


if __name__ == "__main__":
    key = jax.random.PRNGKey(0)
    k_params, k_s1, k_a1, k_s2, k_a2 = jax.random.split(key, 5)

    n_obs, n_act = 8, 4
    params = init_params(k_params, n_obs, n_act)

    # Case 1: tiny batch -> single tile, full-dim blocks.
    B1 = 8
    state1 = jax.random.normal(k_s1, (B1, n_obs), jnp.float32)
    action1 = jax.random.normal(k_a1, (B1, n_act), jnp.float32)
    out1 = jax.block_until_ready(qnetwork_forward(state1, action1, params))
    ref1 = _reference(state1, action1, params)
    assert out1.shape == (B1, 1)
    # bf16 matmuls -> loose tolerance vs f32 reference.
    assert jnp.allclose(out1, ref1, atol=5e-2, rtol=5e-2)

    # Case 2: batch not divisible by the tile -> multi-tile grid, padding, lane-dense output.
    B2 = 40
    state2 = jax.random.normal(k_s2, (B2, n_obs), jnp.float32)
    action2 = jax.random.normal(k_a2, (B2, n_act), jnp.float32)
    out2 = jax.block_until_ready(qnetwork_forward(state2, action2, params, tile_m=16))
    ref2 = _reference(state2, action2, params)
    assert out2.shape == (B2, 1)
    assert jnp.allclose(out2, ref2, atol=5e-2, rtol=5e-2)

    print("KERNEL_OK")
</pallas_src>

<mosaic_0001>
module attributes {stable_mosaic.version = 11 : i64} {
  func.func @qnetwork_kernel(%arg0: i32, %arg1: memref<8x12xbf16, #tpu.memory_space<vmem>>, %arg2: memref<12x256xbf16, #tpu.memory_space<vmem>>, %arg3: memref<1x256xf32, #tpu.memory_space<vmem>>, %arg4: memref<256x256xbf16, #tpu.memory_space<vmem>>, %arg5: memref<1x256xf32, #tpu.memory_space<vmem>>, %arg6: memref<1x256xf32, #tpu.memory_space<vmem>>, %arg7: memref<1x1x8xf32, #tpu.memory_space<vmem>>) attributes {dimension_semantics = [#tpu.dimension_semantics<parallel>], iteration_bounds = array<i64: 1>, scalar_prefetch = 0 : i64, scratch_operands = 0 : i64, tpu.core_type = #tpu.core_type<tc>, window_params = [{transform_indices = @transform_0, window_bounds = array<i64: 8, 12>}, {pipeline_mode = #tpu.pipeline_mode<synchronous>, transform_indices = @transform_1, window_bounds = array<i64: 12, 256>}, {pipeline_mode = #tpu.pipeline_mode<synchronous>, transform_indices = @transform_2, window_bounds = array<i64: 1, 256>}, {pipeline_mode = #tpu.pipeline_mode<synchronous>, transform_indices = @transform_3, window_bounds = array<i64: 256, 256>}, {pipeline_mode = #tpu.pipeline_mode<synchronous>, transform_indices = @transform_4, window_bounds = array<i64: 1, 256>}, {pipeline_mode = #tpu.pipeline_mode<synchronous>, transform_indices = @transform_5, window_bounds = array<i64: 1, 256>}, {transform_indices = @transform_6, window_bounds = array<i64: 1, 1, 8>}]} {
    %c0 = arith.constant 0 : index
    %c0_0 = arith.constant 0 : index
    %0 = vector.load %arg1[%c0, %c0_0] : memref<8x12xbf16, #tpu.memory_space<vmem>>, vector<8x12xbf16>
    %c0_1 = arith.constant 0 : index
    %c0_2 = arith.constant 0 : index
    %1 = vector.load %arg2[%c0_1, %c0_2] : memref<12x256xbf16, #tpu.memory_space<vmem>>, vector<12x256xbf16>
    %cst = arith.constant dense<0.000000e+00> : vector<8x256xf32>
    %2 = tpu.matmul %0, %1, %cst {dimension_numbers = #tpu.dot_dimension_numbers<[1], [0], [0], [1], [0, 0, 1, 1], [], []>} : vector<8x12xbf16>, vector<12x256xbf16>, vector<8x256xf32> -> vector<8x256xf32>
    %c0_3 = arith.constant 0 : index
    %c0_4 = arith.constant 0 : index
    %3 = vector.load %arg3[%c0_3, %c0_4] : memref<1x256xf32, #tpu.memory_space<vmem>>, vector<1x256xf32>
    %4 = vector.broadcast %3 : vector<1x256xf32> to vector<8x256xf32>
    %5 = arith.addf %2, %4 : vector<8x256xf32>
    %cst_5 = arith.constant 0.000000e+00 : f32
    %6 = vector.broadcast %cst_5 : f32 to vector<8x256xf32>
    %7 = arith.maximumf %5, %6 : vector<8x256xf32>
    %8 = arith.truncf %7 : vector<8x256xf32> to vector<8x256xbf16>
    %c0_6 = arith.constant 0 : index
    %c0_7 = arith.constant 0 : index
    %9 = vector.load %arg4[%c0_6, %c0_7] : memref<256x256xbf16, #tpu.memory_space<vmem>>, vector<256x256xbf16>
    %cst_8 = arith.constant dense<0.000000e+00> : vector<8x256xf32>
    %10 = tpu.matmul %8, %9, %cst_8 {dimension_numbers = #tpu.dot_dimension_numbers<[1], [0], [0], [1], [0, 0, 1, 1], [], []>} : vector<8x256xbf16>, vector<256x256xbf16>, vector<8x256xf32> -> vector<8x256xf32>
    %c0_9 = arith.constant 0 : index
    %c0_10 = arith.constant 0 : index
    %11 = vector.load %arg5[%c0_9, %c0_10] : memref<1x256xf32, #tpu.memory_space<vmem>>, vector<1x256xf32>
    %12 = vector.broadcast %11 : vector<1x256xf32> to vector<8x256xf32>
    %13 = arith.addf %10, %12 : vector<8x256xf32>
    %cst_11 = arith.constant 0.000000e+00 : f32
    %14 = vector.broadcast %cst_11 : f32 to vector<8x256xf32>
    %15 = arith.maximumf %13, %14 : vector<8x256xf32>
    %c0_12 = arith.constant 0 : index
    %c0_13 = arith.constant 0 : index
    %16 = vector.load %arg6[%c0_12, %c0_13] : memref<1x256xf32, #tpu.memory_space<vmem>>, vector<1x256xf32>
    %17 = vector.broadcast %16 : vector<1x256xf32> to vector<8x256xf32>
    %18 = arith.mulf %15, %17 : vector<8x256xf32>
    %cst_14 = arith.constant dense<0.000000e+00> : vector<8xf32>
    %19 = vector.multi_reduction <add>, %18, %cst_14 [1] : vector<8x256xf32> to vector<8xf32>
    %20 = vector.shape_cast %19 : vector<8xf32> to vector<1x1x8xf32>
    %c0_15 = arith.constant 0 : index
    %c0_16 = arith.constant 0 : index
    %c0_17 = arith.constant 0 : index
    %21 = vector.load %arg7[%c0_15, %c0_16, %c0_17] : memref<1x1x8xf32, #tpu.memory_space<vmem>>, vector<1x1x8xf32>
    tpu.vector_store %arg7[%c0_15, %c0_16, %c0_17], %20 {strides = array<i32>} : memref<1x1x8xf32, #tpu.memory_space<vmem>>, vector<1x1x8xf32>,
    return
  }
  func.func @transform_0(%arg0: i32) -> (i32, i32) {
    %c0_i32 = arith.constant 0 : i32
    %c0_i32_0 = arith.constant 0 : i32
    return %arg0, %c0_i32 : i32, i32
  }
  func.func @transform_1(%arg0: i32) -> (i32, i32) {
    %c0_i32 = arith.constant 0 : i32
    %c0_i32_0 = arith.constant 0 : i32
    %c0_i32_1 = arith.constant 0 : i32
    return %c0_i32, %c0_i32_0 : i32, i32
  }
  func.func @transform_2(%arg0: i32) -> (i32, i32) {
    %c0_i32 = arith.constant 0 : i32
    %c0_i32_0 = arith.constant 0 : i32
    %c0_i32_1 = arith.constant 0 : i32
    return %c0_i32, %c0_i32_0 : i32, i32
  }
  func.func @transform_3(%arg0: i32) -> (i32, i32) {
    %c0_i32 = arith.constant 0 : i32
    %c0_i32_0 = arith.constant 0 : i32
    %c0_i32_1 = arith.constant 0 : i32
    return %c0_i32, %c0_i32_0 : i32, i32
  }
  func.func @transform_4(%arg0: i32) -> (i32, i32) {
    %c0_i32 = arith.constant 0 : i32
    %c0_i32_0 = arith.constant 0 : i32
    %c0_i32_1 = arith.constant 0 : i32
    return %c0_i32, %c0_i32_0 : i32, i32
  }
  func.func @transform_5(%arg0: i32) -> (i32, i32) {
    %c0_i32 = arith.constant 0 : i32
    %c0_i32_0 = arith.constant 0 : i32
    %c0_i32_1 = arith.constant 0 : i32
    return %c0_i32, %c0_i32_0 : i32, i32
  }
  func.func @transform_6(%arg0: i32) -> (i32, i32, i32) {
    %c0_i32 = arith.constant 0 : i32
    %c0_i32_0 = arith.constant 0 : i32
    %c0_i32_1 = arith.constant 0 : i32
    return %arg0, %c0_i32, %c0_i32_0 : i32, i32, i32
  }
}

</mosaic_0001>

<llo_original>
// kernel: tpu_custom_call.1
$region0: #{tpu_custom_call.1}
  #allocation0 [shape = 'u32[]', space=smem, size = 0x4, offset = 0x4, fixed_abs, tag = 'smem constant byte address 0x4 - core index']
  #allocation1 [shape = 'u32[144,128]{1,0:T(1,128)}', space=vmem, size = 0x12000, scoped, tag = 'internal scratch']
  %s0 = inlined_call_operand.hbm [shape: bf16[8,12], index: 0, kind: input, shape index: {}]
  %s1 = inlined_call_operand.hbm [shape: bf16[12,256], index: 1, kind: input, shape index: {}]
  %s2 = inlined_call_operand.vmem [shape: f32[1,256], index: 2, kind: input, shape index: {}]
  %s3 = inlined_call_operand.hbm [shape: bf16[256,256], index: 3, kind: input, shape index: {}]
  %s4 = inlined_call_operand.vmem [shape: f32[1,256], index: 4, kind: input, shape index: {}]
  %s5 = inlined_call_operand.vmem [shape: f32[1,256], index: 5, kind: input, shape index: {}]
  %s6 = inlined_call_operand.hbm [shape: f32[1,1,8], index: 6, kind: output, shape index: {}]
  %s7 = sld [smem:[#allocation0]]
  $region46: #{tpu_custom_call.1} parent=0
    _
  %s9 = ssub.s32 1, %s7
  %s10 = scalar_select 0, %s9, %s7
  $region1: #{tpu_custom_call.1} parent=0
    #allocation2 [shape = 'u8[2048]{0}', space=vmem, size = 0x800, scoped, tag = 'input window, operand 0, single buffered']
    #allocation3 [shape = 's32[1]{0}', space=sflag, size = 0x4, scoped, tag = 'scoped memory for tpu_custom_call.1']
    #allocation4 [shape = 's32[1]{0}', space=sflag, size = 0x4, scoped, tag = 'scoped memory for tpu_custom_call.1']
    #allocation5 [shape = 'u8[8192]{0}', space=vmem, size = 0x2000, scoped, tag = 'input window, operand 1, single buffered']
    #allocation6 [shape = 's32[1]{0}', space=sflag, size = 0x4, scoped, tag = 'scoped memory for tpu_custom_call.1']
    #allocation7 [shape = 'u8[131072]{0}', space=vmem, size = 0x20000, scoped, tag = 'input window, operand 3, single buffered']
    #allocation8 [shape = 'u8[512]{0}', space=vmem, size = 0x400, scoped, tag = 'output window, operand 0, single buffered']
    %11 = vsyncpa [#allocation3], 0
    %12 = vsyncpa [#allocation6], 0
    %13 = vsyncpa [#allocation4], 0
    // Predicated region
    $region2: #{tpu_custom_call.1} parent=1 // pred_check
      _
    $region3: #{tpu_custom_call.1} parent=1 // pred_check_branch
      %15 = sbr.rel (0) target = $region5
    $region4: #{tpu_custom_call.1} parent=1 // pred_region
      %s17 = ssub.s32 64, 64
      %18 = vsyncadd [#allocation3], %s17
      %s20 = sshll.u32 [#allocation2], 4
      %s21 = int_to_ptr.vmem [resolvable:$true] %s20
      %23 = dma.hbm_to_vmem [thread:$0]  %s0, 64, %s21, [#allocation3]
    $region5: #{tpu_custom_call.1} parent=1 // pred_fallthru
      _
    // Predicated region
    $region6: #{tpu_custom_call.1} parent=1 // pred_check
      _
    $region7: #{tpu_custom_call.1} parent=1 // pred_check_branch
      %25 = sbr.rel (0) target = $region9
    $region8: #{tpu_custom_call.1} parent=1 // pred_region
      %s27 = ssub.s32 256, 256
      %28 = vsyncadd [#allocation6], %s27
      %s29 = sshll.u32 [#allocation5], 4
      %s30 = int_to_ptr.vmem [resolvable:$true] %s29
      %35 = dma.hbm_to_vmem [thread:$0]  %s1, 256, %s30, [#allocation6], 128, 128, 8
    $region9: #{tpu_custom_call.1} parent=1 // pred_fallthru
      _
    // Predicated region
    $region10: #{tpu_custom_call.1} parent=1 // pred_check
      _
    $region11: #{tpu_custom_call.1} parent=1 // pred_check_branch
      %37 = sbr.rel (0) target = $region13
    $region12: #{tpu_custom_call.1} parent=1 // pred_region
      _
    $region13: #{tpu_custom_call.1} parent=1 // pred_fallthru
      _
    // Predicated region
    $region14: #{tpu_custom_call.1} parent=1 // pred_check
      _
    $region15: #{tpu_custom_call.1} parent=1 // pred_check_branch
      %39 = sbr.rel (0) target = $region17
    $region16: #{tpu_custom_call.1} parent=1 // pred_region
      %s41 = ssub.s32 4096, 4096
      %42 = vsyncadd [#allocation6], %s41
      %s43 = sshll.u32 [#allocation7], 4
      %s44 = int_to_ptr.vmem [resolvable:$true] %s43
      %49 = dma.hbm_to_vmem [thread:$0]  %s3, 4096, %s44, [#allocation6], 128, 128, 8
    $region17: #{tpu_custom_call.1} parent=1 // pred_fallthru
      _
    // Predicated region
    $region18: #{tpu_custom_call.1} parent=1 // pred_check
      _
    $region19: #{tpu_custom_call.1} parent=1 // pred_check_branch
      %51 = sbr.rel (0) target = $region21
    $region20: #{tpu_custom_call.1} parent=1 // pred_region
      _
    $region21: #{tpu_custom_call.1} parent=1 // pred_fallthru
      _
    // Predicated region
    $region22: #{tpu_custom_call.1} parent=1 // pred_check
      _
    $region23: #{tpu_custom_call.1} parent=1 // pred_check_branch
      %53 = sbr.rel (0) target = $region25
    $region24: #{tpu_custom_call.1} parent=1 // pred_region
      _
    $region25: #{tpu_custom_call.1} parent=1 // pred_fallthru
      _
    // Predicated region
    $region26: #{tpu_custom_call.1} parent=1 // pred_check
      _
    $region27: #{tpu_custom_call.1} parent=1 // pred_check_branch
      %55 = sbr.rel (0) target = $region29
    $region28: #{tpu_custom_call.1} parent=1 // pred_region
      %56 = dma.done [#allocation3], 64
    $region29: #{tpu_custom_call.1} parent=1 // pred_fallthru
      _
    // Predicated region
    $region30: #{tpu_custom_call.1} parent=1 // pred_check
      _
    $region31: #{tpu_custom_call.1} parent=1 // pred_check_branch
      %58 = sbr.rel (0) target = $region33
    $region32: #{tpu_custom_call.1} parent=1 // pred_region
      %59 = dma.done [#allocation6], 256
    $region33: #{tpu_custom_call.1} parent=1 // pred_fallthru
      _
    // Predicated region
    $region34: #{tpu_custom_call.1} parent=1 // pred_check
      _
    $region35: #{tpu_custom_call.1} parent=1 // pred_check_branch
      %61 = sbr.rel (0) target = $region37
    $region36: #{tpu_custom_call.1} parent=1 // pred_region
      %62 = dma.done [#allocation6], 4096
    $region37: #{tpu_custom_call.1} parent=1 // pred_fallthru
      _
    %v64 = vld [vmem:[#allocation2] sm:$0xf]
    %v65 = vld [vmem:[#allocation5] sm:$0xff]
    %v66 = vld [vmem:[#allocation5 + $0x8] sm:$0x33]
    %v67 = vld [vmem:[%s2] sm:$0x3]
    %v69 = vlaneseq
    %v70 = vshrl.u32 %v69, 7
    %v71 = vsub.s32 0, %v70
    %v72 = vrot.slane %v67, %v71
    %v73 = vlaneseq
    %v74 = vshrl.u32 %v73, 7
    %v75 = vsub.s32 1, %v74
    %v76 = vrot.slane %v67, %v75
    %v81 = vunpack.c.l.b16 %v65
    %v82 = vunpack.c.h.b16 %v65
    %v83 = vunpack.c.l.b16 %v66
    %v84 = vunpack.c.h.b16 %v66
    %v85 = vpack.c.b16 %v83, %v81
    %v86 = vpack.c.b16 %v84, %v82
    %vm87 = vcmask 97280
    %v89 = vsel %vm87, %v64, 0
    %vm91 = vcmask 1045504
    %v93 = vsel %vm91, %v85, 0
    %v96 = vsel %vm91, %v86, 0
    %98 = vmatprep.subr.bf16.mxu0 0
    %99 = vmatpush1.bf16.msra.mxu0 0
    %100 = vmatprep.subr.bf16.mxu0 0
    %101 = vmatpush1.bf16.msra.mxu0 0
    %102 = vmatprep.subr.bf16.mxu0 0
    %103 = vmatpush1.bf16.msra.mxu0 0
    %104 = vmatprep.subr.bf16.mxu0 0
    %105 = vmatpush1.bf16.msra.mxu0 0
    %106 = vmatprep.subr.bf16.mxu0 0
    %107 = vmatpush1.bf16.msra.mxu0 0
    %108 = vmatprep.subr.bf16.mxu0 0
    %109 = vmatpush1.bf16.msra.mxu0 0
    %110 = vmatprep.subr.bf16.mxu0 0
    %111 = vmatpush1.bf16.msra.mxu0 0
    %112 = vmatprep.subr.bf16.mxu0 %v96
    %113 = vmatpush1.bf16.msra.mxu0 %v93
    %114 = vmatprep.subr.bf16.mxu0 0
    %115 = vmatpush2.bf16.msra.mxu0 0
    %116 = vmatprep.subr.bf16.mxu0 0
    %117 = vmatpush2.bf16.msra.mxu0 0
    %118 = vmatprep.subr.bf16.mxu0 0
    %119 = vmatpush2.bf16.msra.mxu0 0
    %120 = vmatprep.subr.bf16.mxu0 0
    %121 = vmatpush2.bf16.msra.mxu0 0
    %122 = vmatprep.subr.bf16.mxu0 0
    %123 = vmatpush2.bf16.msra.mxu0 0
    %124 = vmatprep.subr.bf16.mxu0 0
    %125 = vmatpush2.bf16.msra.mxu0 0
    %126 = vmatprep.subr.bf16.mxu0 0
    %127 = vmatpush2.bf16.msra.mxu0 0
    %128 = vmatprep.subr.bf16.mxu0 0
    %129 = vmatpush2.bf16.msra.mxu0 0
    %130 = vmatprep.mubr.bf16.mxu0 0
    %131 = vmatmul.mubr.bf16.gmra.mxu0 %v89
    %v132 = vpop.f32.mrf.mxu0
    %v133 = vadd.f32 %v72, %v132
    %v134 = vpop.f32.mrf.mxu0
    %v135 = vadd.f32 %v76, %v134
    %v136 = vpop.f32.mrf.mxu0
    %v137 = vpop.f32.mrf.mxu0
    %138 = vdwg.mxu0
    %v139 = vmax.f32 %v133, 0.0
    %v140 = vmax.f32 %v135, 0.0
    %v141 = vpack.c.bf16 %v139, %v139
    %v142 = vpack.c.bf16 %v140, %v140
    %v143 = vld [vmem:[#allocation7] sm:$0xff]
    %v144 = vld [vmem:[#allocation7 + $0x8] sm:$0xff]
    %v145 = vld [vmem:[#allocation7 + $0x10] sm:$0xff]
    %v146 = vld [vmem:[#allocation7 + $0x18] sm:$0xff]
    %v147 = vld [vmem:[#allocation7 + $0x20] sm:$0xff]
    %v148 = vld [vmem:[#allocation7 + $0x28] sm:$0xff]
    %v149 = vld [vmem:[#allocation7 + $0x30] sm:$0xff]
    %v150 = vld [vmem:[#allocation7 + $0x38] sm:$0xff]
    %v151 = vld [vmem:[#allocation7 + $0x40] sm:$0xff]
    %v152 = vld [vmem:[#allocation7 + $0x48] sm:$0xff]
    %v153 = vld [vmem:[#allocation7 + $0x50] sm:$0xff]
    %v154 = vld [vmem:[#allocation7 + $0x58] sm:$0xff]
    %v155 = vld [vmem:[#allocation7 + $0x60] sm:$0xff]
    %v156 = vld [vmem:[#allocation7 + $0x68] sm:$0xff]
    %v157 = vld [vmem:[#allocation7 + $0x70] sm:$0xff]
    %v158 = vld [vmem:[#allocation7 + $0x78] sm:$0xff]
    %v159 = vld [vmem:[#allocation7 + $0x80] sm:$0xff]
    %v160 = vld [vmem:[#allocation7 + $0x88] sm:$0xff]
    %v161 = vld [vmem:[#allocation7 + $0x90] sm:$0xff]
    %v162 = vld [vmem:[#allocation7 + $0x98] sm:$0xff]
    %v163 = vld [vmem:[#allocation7 + $0xa0] sm:$0xff]
    %v164 = vld [vmem:[#allocation7 + $0xa8] sm:$0xff]
    %v165 = vld [vmem:[#allocation7 + $0xb0] sm:$0xff]
    %v166 = vld [vmem:[#allocation7 + $0xb8] sm:$0xff]
    %v167 = vld [vmem:[#allocation7 + $0xc0] sm:$0xff]
    %v168 = vld [vmem:[#allocation7 + $0xc8] sm:$0xff]
    %v169 = vld [vmem:[#allocation7 + $0xd0] sm:$0xff]
    %v170 = vld [vmem:[#allocation7 + $0xd8] sm:$0xff]
    %v171 = vld [vmem:[#allocation7 + $0xe0] sm:$0xff]
    %v172 = vld [vmem:[#allocation7 + $0xe8] sm:$0xff]
    %v173 = vld [vmem:[#allocation7 + $0xf0] sm:$0xff]
    %v174 = vld [vmem:[#allocation7 + $0xf8] sm:$0xff]
    %v175 = vld [vmem:[%s4] sm:$0x3]
    %v177 = vlaneseq
    %v178 = vshrl.u32 %v177, 7
    %v179 = vsub.s32 0, %v178
    %v180 = vrot.slane %v175, %v179
    %v181 = vlaneseq
    %v182 = vshrl.u32 %v181, 7
    %v183 = vsub.s32 1, %v182
    %v184 = vrot.slane %v175, %v183
    %v219 = vunpack.c.l.b16 %v143
    %v220 = vunpack.c.h.b16 %v143
    %v221 = vunpack.c.l.b16 %v144
    %v222 = vunpack.c.h.b16 %v144
    %v223 = vunpack.c.l.b16 %v145
    %v224 = vunpack.c.h.b16 %v145
    %v225 = vunpack.c.l.b16 %v146
    %v226 = vunpack.c.h.b16 %v146
    %v227 = vunpack.c.l.b16 %v147
    %v228 = vunpack.c.h.b16 %v147
    %v229 = vunpack.c.l.b16 %v148
    %v230 = vunpack.c.h.b16 %v148
    %v231 = vunpack.c.l.b16 %v149
    %v232 = vunpack.c.h.b16 %v149
    %v233 = vunpack.c.l.b16 %v150
    %v234 = vunpack.c.h.b16 %v150
    %v235 = vunpack.c.l.b16 %v151
    %v236 = vunpack.c.h.b16 %v151
    %v237 = vunpack.c.l.b16 %v152
    %v238 = vunpack.c.h.b16 %v152
    %v239 = vunpack.c.l.b16 %v153
    %v240 = vunpack.c.h.b16 %v153
    %v241 = vunpack.c.l.b16 %v154
    %v242 = vunpack.c.h.b16 %v154
    %v243 = vunpack.c.l.b16 %v155
    %v244 = vunpack.c.h.b16 %v155
    %v245 = vunpack.c.l.b16 %v156
    %v246 = vunpack.c.h.b16 %v156
    %v247 = vunpack.c.l.b16 %v157
    %v248 = vunpack.c.h.b16 %v157
    %v249 = vunpack.c.l.b16 %v158
    %v250 = vunpack.c.h.b16 %v158
    %v251 = vunpack.c.l.b16 %v159
    %v252 = vunpack.c.h.b16 %v159
    %v253 = vunpack.c.l.b16 %v160
    %v254 = vunpack.c.h.b16 %v160
    %v255 = vunpack.c.l.b16 %v161
    %v256 = vunpack.c.h.b16 %v161
    %v257 = vunpack.c.l.b16 %v162
    %v258 = vunpack.c.h.b16 %v162
    %v259 = vunpack.c.l.b16 %v163
    %v260 = vunpack.c.h.b16 %v163
    %v261 = vunpack.c.l.b16 %v164
    %v262 = vunpack.c.h.b16 %v164
    %v263 = vunpack.c.l.b16 %v165
    %v264 = vunpack.c.h.b16 %v165
    %v265 = vunpack.c.l.b16 %v166
    %v266 = vunpack.c.h.b16 %v166
    %v267 = vunpack.c.l.b16 %v167
    %v268 = vunpack.c.h.b16 %v167
    %v269 = vunpack.c.l.b16 %v168
    %v270 = vunpack.c.h.b16 %v168
    %v271 = vunpack.c.l.b16 %v169
    %v272 = vunpack.c.h.b16 %v169
    %v273 = vunpack.c.l.b16 %v170
    %v274 = vunpack.c.h.b16 %v170
    %v275 = vunpack.c.l.b16 %v171
    %v276 = vunpack.c.h.b16 %v171
    %v277 = vunpack.c.l.b16 %v172
    %v278 = vunpack.c.h.b16 %v172
    %v279 = vunpack.c.l.b16 %v173
    %v280 = vunpack.c.h.b16 %v173
    %v281 = vunpack.c.l.b16 %v174
    %v282 = vunpack.c.h.b16 %v174
    %v283 = vpack.c.b16 %v221, %v219
    %v284 = vpack.c.b16 %v222, %v220
    %v285 = vpack.c.b16 %v225, %v223
    %v286 = vpack.c.b16 %v226, %v224
    %v287 = vpack.c.b16 %v229, %v227
    %v288 = vpack.c.b16 %v230, %v228
    %v289 = vpack.c.b16 %v233, %v231
    %v290 = vpack.c.b16 %v234, %v232
    %v291 = vpack.c.b16 %v237, %v235
    %v292 = vpack.c.b16 %v238, %v236
    %v293 = vpack.c.b16 %v241, %v239
    %v294 = vpack.c.b16 %v242, %v240
    %v295 = vpack.c.b16 %v245, %v243
    %v296 = vpack.c.b16 %v246, %v244
    %v297 = vpack.c.b16 %v249, %v247
    %v298 = vpack.c.b16 %v250, %v248
    %v299 = vpack.c.b16 %v253, %v251
    %v300 = vpack.c.b16 %v254, %v252
    %v301 = vpack.c.b16 %v257, %v255
    %v302 = vpack.c.b16 %v258, %v256
    %v303 = vpack.c.b16 %v261, %v259
    %v304 = vpack.c.b16 %v262, %v260
    %v305 = vpack.c.b16 %v265, %v263
    %v306 = vpack.c.b16 %v266, %v264
    %v307 = vpack.c.b16 %v269, %v267
    %v308 = vpack.c.b16 %v270, %v268
    %v309 = vpack.c.b16 %v273, %v271
    %v310 = vpack.c.b16 %v274, %v272
    %v311 = vpack.c.b16 %v277, %v275
    %v312 = vpack.c.b16 %v278, %v276
    %v313 = vpack.c.b16 %v281, %v279
    %v314 = vpack.c.b16 %v282, %v280
    %347 = vmatprep.subr.bf16.mxu0 %v298
    %348 = vmatpush1.bf16.msra.mxu0 %v297
    %349 = vmatprep.subr.bf16.mxu0 %v296
    %350 = vmatpush1.bf16.msra.mxu0 %v295
    %351 = vmatprep.subr.bf16.mxu0 %v294
    %352 = vmatpush1.bf16.msra.mxu0 %v293
    %353 = vmatprep.subr.bf16.mxu0 %v292
    %354 = vmatpush1.bf16.msra.mxu0 %v291
    %355 = vmatprep.subr.bf16.mxu0 %v290
    %356 = vmatpush1.bf16.msra.mxu0 %v289
    %357 = vmatprep.subr.bf16.mxu0 %v288
    %358 = vmatpush1.bf16.msra.mxu0 %v287
    %359 = vmatprep.subr.bf16.mxu0 %v286
    %360 = vmatpush1.bf16.msra.mxu0 %v285
    %361 = vmatprep.subr.bf16.mxu0 %v284
    %362 = vmatpush1.bf16.msra.mxu0 %v283
    %363 = vmatprep.subr.bf16.mxu0 %v314
    %364 = vmatpush2.bf16.msra.mxu0 %v313
    %365 = vmatprep.subr.bf16.mxu0 %v312
    %366 = vmatpush2.bf16.msra.mxu0 %v311
    %367 = vmatprep.subr.bf16.mxu0 %v310
    %368 = vmatpush2.bf16.msra.mxu0 %v309
    %369 = vmatprep.subr.bf16.mxu0 %v308
    %370 = vmatpush2.bf16.msra.mxu0 %v307
    %371 = vmatprep.subr.bf16.mxu0 %v306
    %372 = vmatpush2.bf16.msra.mxu0 %v305
    %373 = vmatprep.subr.bf16.mxu0 %v304
    %374 = vmatpush2.bf16.msra.mxu0 %v303
    %375 = vmatprep.subr.bf16.mxu0 %v302
    %376 = vmatpush2.bf16.msra.mxu0 %v301
    %377 = vmatprep.subr.bf16.mxu0 %v300
    %378 = vmatpush2.bf16.msra.mxu0 %v299
    %379 = vmatprep.mubr.bf16.mxu0 %v142
    %380 = vmatmul.mubr.bf16.gmra.mxu0 %v141
    %v381 = vpop.f32.mrf.mxu0
    %v382 = vadd.f32 %v180, %v381
    %v383 = vpop.f32.mrf.mxu0
    %v384 = vadd.f32 %v184, %v383
    %v385 = vpop.f32.mrf.mxu0
    %v386 = vpop.f32.mrf.mxu0
    %387 = vdwg.mxu0
    %v388 = vmax.f32 %v382, 0.0
    %v389 = vmax.f32 %v384, 0.0
    %v390 = vld [vmem:[%s5] sm:$0x3]
    %v392 = vlaneseq
    %v393 = vshrl.u32 %v392, 7
    %v394 = vsub.s32 0, %v393
    %v395 = vrot.slane %v390, %v394
    %v396 = vlaneseq
    %v397 = vshrl.u32 %v396, 7
    %v398 = vsub.s32 1, %v397
    %v399 = vrot.slane %v390, %v398
    %v402 = vmul.f32 %v388, %v395
    %v403 = vmul.f32 %v389, %v399
    %v404 = vadd.f32 %v402, %v403
    %405 = vadd.xlane.f32.xlu0 %v404
    %v406 = vpop.xlane.xlu0 %405
    %v408 = vlaneseq
    %v409 = vand.u32 %v408, 127
    %v410 = vlaneseq
    %v411 = vshrl.u32 %v410, 7
    %v412 = vsub.s32 %v409, %v411
    %v413 = vrot.slane %v406, %v412
    %vm415 = vcmask 57344
    %416 = vst.msk [vmem:[#allocation8] sm:$0x1] %vm415, %v413
    // Predicated region
    $region38: #{tpu_custom_call.1} parent=1 // pred_check
      _
    $region39: #{tpu_custom_call.1} parent=1 // pred_check_branch
      %418 = sbr.rel (0) target = $region41
    $region40: #{tpu_custom_call.1} parent=1 // pred_region
      %s420 = ssub.s32 16, 16
      %421 = vsyncadd [#allocation4], %s420
      %s423 = sshll.u32 [#allocation8], 4
      %s424 = int_to_ptr.vmem [resolvable:$true] %s423
      %426 = dma.vmem_to_hbm [thread:$0]  %s424, 16, %s6, [#allocation4]
    $region41: #{tpu_custom_call.1} parent=1 // pred_fallthru
      _
    // Predicated region
    $region42: #{tpu_custom_call.1} parent=1 // pred_check
      _
    $region43: #{tpu_custom_call.1} parent=1 // pred_check_branch
      %428 = sbr.rel (0) target = $region45
    $region44: #{tpu_custom_call.1} parent=1 // pred_region
      %429 = dma.done [#allocation4], 16
    $region45: #{tpu_custom_call.1} parent=1 // pred_fallthru
      _
    %430 = vsyncpa [#allocation3], 1
    %431 = vsyncpa [#allocation6], 1
    %432 = vsyncpa [#allocation4], 1

</llo_original>
